<compile_context>
chip_gen: v6e
topology: v6e:2x2x1
jax: 0.10.0
libtpu: 0.0.40
codegen_flags: <defaults>
</compile_context>

<pallas_src>
import jax
import jax.numpy as jnp
from jax.experimental import pallas as pl
from jax.experimental.pallas import tpu as pltpu

HIDDEN = 128
LANE = 128


def dqn_kernel(x_ref, w1_ref, b1_ref, w2_ref, b2_ref, w3_ref, b3_ref, o_ref):
    # 2 bf16 MXU matmuls + 1 small f32 head matmul, all VMEM-resident.
    x = x_ref[...].astype(jnp.bfloat16)                                   # in-kernel cast (free)
    h1 = jnp.dot(x, w1_ref[...], preferred_element_type=jnp.float32) + b1_ref[...]
    h1 = jnp.maximum(h1, 0.0).astype(jnp.bfloat16)                        # f32 VPU math, then cast
    h2 = jnp.dot(h1, w2_ref[...], preferred_element_type=jnp.float32) + b2_ref[...]
    h2 = jnp.maximum(h2, 0.0)                                             # stays f32 for the f32 head
    out = jnp.dot(h2, w3_ref[...], preferred_element_type=jnp.float32) + b3_ref[...]
    o_ref[...] = out.astype(o_ref.dtype)                                  # lane-dense bf16 store


def _round_up(v, m):
    return (v + m - 1) // m * m


def prepare_params(params):
    """One-time parameter prep (do NOT call per forward): bf16 hidden-layer
    weights, f32 head, head padded 21 -> 128 lanes for an unmasked writeback."""
    w1, b1, w2, b2, w3, b3 = params
    out_f = w3.shape[1]
    out_pad = _round_up(out_f, LANE)
    if out_pad != out_f:
        w3 = jnp.pad(w3, ((0, 0), (0, out_pad - out_f)))
        b3 = jnp.pad(b3, ((0, 0), (0, out_pad - out_f)))
    return dict(
        w1=w1.astype(jnp.bfloat16), b1=b1.astype(jnp.float32),
        w2=w2.astype(jnp.bfloat16), b2=b2.astype(jnp.float32),
        w3=w3.astype(jnp.float32),  b3=b3.astype(jnp.float32),   # f32 head (accuracy)
        out_f=out_f,
    )


def dqn_forward(x, prepped, *, batch_tile=1024, single_block_rows=256):
    """x: (B, input_size) float32. Returns (B, output_size) float32."""
    w1, b1 = prepped["w1"], prepped["b1"]
    w2, b2 = prepped["w2"], prepped["b2"]
    w3, b3 = prepped["w3"], prepped["b3"]
    out_f = prepped["out_f"]

    B, in_f = x.shape
    hid = w1.shape[1]
    out_pad = w3.shape[1]

    # Batch handling: small B -> single un-gridded VMEM-resident block (no
    # pipelining overhead); large B -> big tiles (amortize per-step overhead and
    # fill MXU M) but always >= 2 steps so v7x's 2 TensorCores split the work.
    if B <= single_block_rows:
        tile = max(8, _round_up(B, 8))
        padded_B = tile
    else:
        tile = min(batch_tile, _round_up(-(-B // 2), 8))
        padded_B = _round_up(B, tile)
    if padded_B != B:
        x = jnp.pad(x, ((0, padded_B - B), (0, 0)))   # zero rows; sliced off below

    grid = (padded_B // tile,)

    # Grid-invariant operands: index_map returns (0, 0) every step -> no re-fetch.
    # (~0.2 MB total incl. double buffers, so pl.Buffered(1) is not needed.)
    const = lambda shape: pl.BlockSpec(shape, lambda i: (0, 0))
    in_specs = [
        pl.BlockSpec((tile, in_f), lambda i: (i, 0)),   # x (f32, streamed over batch)
        const((in_f, hid)),                             # w1 (bf16)
        const((1, hid)),                                # b1 (f32)
        const((hid, hid)),                              # w2 (bf16)
        const((1, hid)),                                # b2 (f32)
        const((hid, out_pad)),                          # w3 (f32, lane-padded)
        const((1, out_pad)),                            # b3 (f32, lane-padded)
    ]
    out_specs = pl.BlockSpec((tile, out_pad), lambda i: (i, 0))

    flops = 2 * padded_B * (in_f * hid + hid * hid + hid * out_pad)
    bytes_accessed = (
        x.size * x.dtype.itemsize
        + sum(int(a.size) * a.dtype.itemsize for a in (w1, b1, w2, b2, w3, b3))
        + padded_B * out_pad * 2                         # bf16 writeback
    )

    out = pl.pallas_call(
        dqn_kernel,
        out_shape=jax.ShapeDtypeStruct((padded_B, out_pad), jnp.bfloat16),
        grid_spec=pltpu.PrefetchScalarGridSpec(
            num_scalar_prefetch=0,
            grid=grid,
            in_specs=in_specs,
            out_specs=out_specs,
        ),
        compiler_params=pltpu.CompilerParams(
            dimension_semantics=("parallel",),
            # Honest bound: tile=2048 worst case is ~6 MB (I/O double buffers +
            # f32 h1/h2 intermediates); 16 MiB leaves ample headroom on all gens.
            vmem_limit_bytes=16 * 1024 * 1024,
        ),
        cost_estimate=pl.CostEstimate(
            flops=flops, transcendentals=0, bytes_accessed=int(bytes_accessed)
        ),
    )(x, w1, b1, w2, b2, w3, b3)

    # Single fused slice+cast back to the module's true (B, out_f) f32 output.
    return out[:B, :out_f].astype(jnp.float32)


def init_dqn_params(key, input_size, output_size, hidden=HIDDEN):
    """Deterministic synthetic parameters matching nn.Linear init, stored as
    (in, out) so the kernel computes x @ W + b (== PyTorch's x @ W.T + b)."""
    ks = jax.random.split(key, 6)

    def linear(kw, kb, fan_in, fan_out):
        bound = 1.0 / jnp.sqrt(jnp.float32(fan_in))
        w = jax.random.uniform(kw, (fan_in, fan_out), jnp.float32, -bound, bound)
        b = jax.random.uniform(kb, (1, fan_out), jnp.float32, -bound, bound)
        return w, b

    w1, b1 = linear(ks[0], ks[1], input_size, hidden)
    w2, b2 = linear(ks[2], ks[3], hidden, hidden)
    w3, b3 = linear(ks[4], ks[5], hidden, output_size)
    return (w1, b1, w2, b2, w3, b3)


def dqn_forward_ref(x, params):
    """Pure-JAX f32 reference of the PyTorch forward."""
    w1, b1, w2, b2, w3, b3 = params
    h1 = jnp.maximum(x @ w1 + b1, 0.0)
    h2 = jnp.maximum(h1 @ w2 + b2, 0.0)
    return h2 @ w3 + b3


# TODO(synk): ReplayBuffer / epsilon-greedy chooseAction / game-state encoding are
# host-side control logic, not part of the tensor forward pass; not kernelized.

if __name__ == "__main__":
    # State vector of size 32, 21 possible actions (see getAvailableActions).
    INPUT_SIZE, OUTPUT_SIZE = 32, 21

    key = jax.random.PRNGKey(0)
    k_x1, k_x2, k_p = jax.random.split(key, 3)
    raw_params = init_dqn_params(k_p, INPUT_SIZE, OUTPUT_SIZE)
    prepped = prepare_params(raw_params)   # one-time: cast + lane-pad the head

    # (a) module's training batch_size=64: single un-gridded VMEM-resident block.
    x_small = jax.random.normal(k_x1, (64, INPUT_SIZE), jnp.float32)
    out_small = jax.block_until_ready(dqn_forward(x_small, prepped))

    # (b) replay-buffer-sized batch: 2 parallel grid steps of 256 rows
    #     (exercises the tiled path and megacore splitting on v7x).
    x_big = jax.random.normal(k_x2, (512, INPUT_SIZE), jnp.float32)
    out_big = jax.block_until_ready(dqn_forward(x_big, prepped))

    for x, out in ((x_small, out_small), (x_big, out_big)):
        ref = dqn_forward_ref(x, raw_params)
        assert out.shape == (x.shape[0], OUTPUT_SIZE)
        max_err = float(jnp.max(jnp.abs(out - ref)))
        # bf16 hidden layers / bf16 output store vs pure-f32 reference.
        assert jnp.allclose(out, ref, atol=5e-2, rtol=5e-2), (
            f"mismatch vs reference (max abs err {max_err})"
        )
        # Layout/transpose-bug guard: greedy-action agreement with the f32
        # reference (lenient threshold -> never trips on fp noise, only on bugs).
        agree = float(jnp.mean(jnp.argmax(out, -1) == jnp.argmax(ref, -1)))
        assert agree >= 0.9, f"argmax agreement too low: {agree}"

    print("KERNEL_OK")
</pallas_src>

<mosaic_0001>
module attributes {stable_mosaic.version = 11 : i64} {
  func.func @dqn_kernel(%arg0: i32, %arg1: memref<64x32xf32, #tpu.memory_space<vmem>>, %arg2: memref<32x128xbf16, #tpu.memory_space<vmem>>, %arg3: memref<1x128xf32, #tpu.memory_space<vmem>>, %arg4: memref<128x128xbf16, #tpu.memory_space<vmem>>, %arg5: memref<1x128xf32, #tpu.memory_space<vmem>>, %arg6: memref<128x128xf32, #tpu.memory_space<vmem>>, %arg7: memref<1x128xf32, #tpu.memory_space<vmem>>, %arg8: memref<64x128xbf16, #tpu.memory_space<vmem>>) attributes {dimension_semantics = [#tpu.dimension_semantics<parallel>], iteration_bounds = array<i64: 1>, scalar_prefetch = 0 : i64, scratch_operands = 0 : i64, tpu.core_type = #tpu.core_type<tc>, window_params = [{transform_indices = @transform_0, window_bounds = array<i64: 64, 32>}, {pipeline_mode = #tpu.pipeline_mode<synchronous>, transform_indices = @transform_1, window_bounds = array<i64: 32, 128>}, {pipeline_mode = #tpu.pipeline_mode<synchronous>, transform_indices = @transform_2, window_bounds = array<i64: 1, 128>}, {pipeline_mode = #tpu.pipeline_mode<synchronous>, transform_indices = @transform_3, window_bounds = array<i64: 128, 128>}, {pipeline_mode = #tpu.pipeline_mode<synchronous>, transform_indices = @transform_4, window_bounds = array<i64: 1, 128>}, {pipeline_mode = #tpu.pipeline_mode<synchronous>, transform_indices = @transform_5, window_bounds = array<i64: 128, 128>}, {pipeline_mode = #tpu.pipeline_mode<synchronous>, transform_indices = @transform_6, window_bounds = array<i64: 1, 128>}, {transform_indices = @transform_7, window_bounds = array<i64: 64, 128>}]} {
    %c0 = arith.constant 0 : index
    %c0_0 = arith.constant 0 : index
    %0 = vector.load %arg1[%c0, %c0_0] : memref<64x32xf32, #tpu.memory_space<vmem>>, vector<64x32xf32>
    %1 = arith.truncf %0 : vector<64x32xf32> to vector<64x32xbf16>
    %c0_1 = arith.constant 0 : index
    %c0_2 = arith.constant 0 : index
    %2 = vector.load %arg2[%c0_1, %c0_2] : memref<32x128xbf16, #tpu.memory_space<vmem>>, vector<32x128xbf16>
    %cst = arith.constant dense<0.000000e+00> : vector<64x128xf32>
    %3 = tpu.matmul %1, %2, %cst {dimension_numbers = #tpu.dot_dimension_numbers<[1], [0], [0], [1], [0, 0, 1, 1], [], []>} : vector<64x32xbf16>, vector<32x128xbf16>, vector<64x128xf32> -> vector<64x128xf32>
    %c0_3 = arith.constant 0 : index
    %c0_4 = arith.constant 0 : index
    %4 = vector.load %arg3[%c0_3, %c0_4] : memref<1x128xf32, #tpu.memory_space<vmem>>, vector<1x128xf32>
    %5 = vector.broadcast %4 : vector<1x128xf32> to vector<64x128xf32>
    %6 = arith.addf %3, %5 : vector<64x128xf32>
    %cst_5 = arith.constant 0.000000e+00 : f32
    %7 = vector.broadcast %cst_5 : f32 to vector<64x128xf32>
    %8 = arith.maximumf %6, %7 : vector<64x128xf32>
    %9 = arith.truncf %8 : vector<64x128xf32> to vector<64x128xbf16>
    %c0_6 = arith.constant 0 : index
    %c0_7 = arith.constant 0 : index
    %10 = vector.load %arg4[%c0_6, %c0_7] : memref<128x128xbf16, #tpu.memory_space<vmem>>, vector<128x128xbf16>
    %cst_8 = arith.constant dense<0.000000e+00> : vector<64x128xf32>
    %11 = tpu.matmul %9, %10, %cst_8 {dimension_numbers = #tpu.dot_dimension_numbers<[1], [0], [0], [1], [0, 0, 1, 1], [], []>} : vector<64x128xbf16>, vector<128x128xbf16>, vector<64x128xf32> -> vector<64x128xf32>
    %c0_9 = arith.constant 0 : index
    %c0_10 = arith.constant 0 : index
    %12 = vector.load %arg5[%c0_9, %c0_10] : memref<1x128xf32, #tpu.memory_space<vmem>>, vector<1x128xf32>
    %13 = vector.broadcast %12 : vector<1x128xf32> to vector<64x128xf32>
    %14 = arith.addf %11, %13 : vector<64x128xf32>
    %cst_11 = arith.constant 0.000000e+00 : f32
    %15 = vector.broadcast %cst_11 : f32 to vector<64x128xf32>
    %16 = arith.maximumf %14, %15 : vector<64x128xf32>
    %c0_12 = arith.constant 0 : index
    %c0_13 = arith.constant 0 : index
    %17 = vector.load %arg6[%c0_12, %c0_13] : memref<128x128xf32, #tpu.memory_space<vmem>>, vector<128x128xf32>
    %cst_14 = arith.constant dense<0.000000e+00> : vector<64x128xf32>
    %18 = tpu.matmul %16, %17, %cst_14 {dimension_numbers = #tpu.dot_dimension_numbers<[1], [0], [0], [1], [0, 0, 1, 1], [], []>} : vector<64x128xf32>, vector<128x128xf32>, vector<64x128xf32> -> vector<64x128xf32>
    %c0_15 = arith.constant 0 : index
    %c0_16 = arith.constant 0 : index
    %19 = vector.load %arg7[%c0_15, %c0_16] : memref<1x128xf32, #tpu.memory_space<vmem>>, vector<1x128xf32>
    %20 = vector.broadcast %19 : vector<1x128xf32> to vector<64x128xf32>
    %21 = arith.addf %18, %20 : vector<64x128xf32>
    %22 = arith.truncf %21 : vector<64x128xf32> to vector<64x128xbf16>
    %c0_17 = arith.constant 0 : index
    %c0_18 = arith.constant 0 : index
    %23 = vector.load %arg8[%c0_17, %c0_18] : memref<64x128xbf16, #tpu.memory_space<vmem>>, vector<64x128xbf16>
    tpu.vector_store %arg8[%c0_17, %c0_18], %22 {strides = array<i32>} : memref<64x128xbf16, #tpu.memory_space<vmem>>, vector<64x128xbf16>,
    return
  }
  func.func @transform_0(%arg0: i32) -> (i32, i32) {
    %c0_i32 = arith.constant 0 : i32
    %c0_i32_0 = arith.constant 0 : i32
    return %arg0, %c0_i32 : i32, i32
  }
  func.func @transform_1(%arg0: i32) -> (i32, i32) {
    %c0_i32 = arith.constant 0 : i32
    %c0_i32_0 = arith.constant 0 : i32
    %c0_i32_1 = arith.constant 0 : i32
    return %c0_i32, %c0_i32_0 : i32, i32
  }
  func.func @transform_2(%arg0: i32) -> (i32, i32) {
    %c0_i32 = arith.constant 0 : i32
    %c0_i32_0 = arith.constant 0 : i32
    %c0_i32_1 = arith.constant 0 : i32
    return %c0_i32, %c0_i32_0 : i32, i32
  }
  func.func @transform_3(%arg0: i32) -> (i32, i32) {
    %c0_i32 = arith.constant 0 : i32
    %c0_i32_0 = arith.constant 0 : i32
    %c0_i32_1 = arith.constant 0 : i32
    return %c0_i32, %c0_i32_0 : i32, i32
  }
  func.func @transform_4(%arg0: i32) -> (i32, i32) {
    %c0_i32 = arith.constant 0 : i32
    %c0_i32_0 = arith.constant 0 : i32
    %c0_i32_1 = arith.constant 0 : i32
    return %c0_i32, %c0_i32_0 : i32, i32
  }
  func.func @transform_5(%arg0: i32) -> (i32, i32) {
    %c0_i32 = arith.constant 0 : i32
    %c0_i32_0 = arith.constant 0 : i32
    %c0_i32_1 = arith.constant 0 : i32
    return %c0_i32, %c0_i32_0 : i32, i32
  }
  func.func @transform_6(%arg0: i32) -> (i32, i32) {
    %c0_i32 = arith.constant 0 : i32
    %c0_i32_0 = arith.constant 0 : i32
    %c0_i32_1 = arith.constant 0 : i32
    return %c0_i32, %c0_i32_0 : i32, i32
  }
  func.func @transform_7(%arg0: i32) -> (i32, i32) {
    %c0_i32 = arith.constant 0 : i32
    %c0_i32_0 = arith.constant 0 : i32
    return %arg0, %c0_i32 : i32, i32
  }
}

</mosaic_0001>

<llo_original>
// kernel: tpu_custom_call.1
$region0: #{tpu_custom_call.1}
  #allocation0 [shape = 'u32[]', space=smem, size = 0x4, offset = 0x4, fixed_abs, tag = 'smem constant byte address 0x4 - core index']
  #allocation1 [shape = 'u32[144,128]{1,0:T(1,128)}', space=vmem, size = 0x12000, scoped, tag = 'internal scratch']
  %s0 = inlined_call_operand.vmem [shape: f32[64,32], index: 0, kind: input, shape index: {}]
  %s1 = inlined_call_operand.vmem [shape: bf16[32,128], index: 1, kind: input, shape index: {}]
  %s2 = inlined_call_operand.vmem [shape: f32[1,128], index: 2, kind: input, shape index: {}]
  %s3 = inlined_call_operand.vmem [shape: bf16[128,128], index: 3, kind: input, shape index: {}]
  %s4 = inlined_call_operand.vmem [shape: f32[1,128], index: 4, kind: input, shape index: {}]
  %s5 = inlined_call_operand.hbm [shape: f32[128,128], index: 5, kind: input, shape index: {}]
  %s6 = inlined_call_operand.vmem [shape: f32[1,128], index: 6, kind: input, shape index: {}]
  %s7 = inlined_call_operand.hbm [shape: bf16[64,128], index: 7, kind: output, shape index: {}]
  %s8 = sld [smem:[#allocation0]]
  $region42: #{tpu_custom_call.1} parent=0
    _
  %s10 = ssub.s32 1, %s8
  %s11 = scalar_select 0, %s10, %s8
  $region1: #{tpu_custom_call.1} parent=0
    #allocation2 [shape = 'u8[65536]{0}', space=vmem, size = 0x10000, scoped, tag = 'input window, operand 5, single buffered']
    #allocation3 [shape = 's32[1]{0}', space=sflag, size = 0x4, scoped, tag = 'scoped memory for tpu_custom_call.1']
    #allocation4 [shape = 's32[1]{0}', space=sflag, size = 0x4, scoped, tag = 'scoped memory for tpu_custom_call.1']
    #allocation5 [shape = 'u8[16384]{0}', space=vmem, size = 0x4000, scoped, tag = 'output window, operand 0, single buffered']
    %12 = vsyncpa [#allocation3], 0
    %13 = vsyncpa [#allocation4], 0
    // Predicated region
    $region2: #{tpu_custom_call.1} parent=1 // pred_check
      _
    $region3: #{tpu_custom_call.1} parent=1 // pred_check_branch
      %15 = sbr.rel (0) target = $region5
    $region4: #{tpu_custom_call.1} parent=1 // pred_region
      _
    $region5: #{tpu_custom_call.1} parent=1 // pred_fallthru
      _
    // Predicated region
    $region6: #{tpu_custom_call.1} parent=1 // pred_check
      _
    $region7: #{tpu_custom_call.1} parent=1 // pred_check_branch
      %17 = sbr.rel (0) target = $region9
    $region8: #{tpu_custom_call.1} parent=1 // pred_region
      _
    $region9: #{tpu_custom_call.1} parent=1 // pred_fallthru
      _
    // Predicated region
    $region10: #{tpu_custom_call.1} parent=1 // pred_check
      _
    $region11: #{tpu_custom_call.1} parent=1 // pred_check_branch
      %19 = sbr.rel (0) target = $region13
    $region12: #{tpu_custom_call.1} parent=1 // pred_region
      _
    $region13: #{tpu_custom_call.1} parent=1 // pred_fallthru
      _
    // Predicated region
    $region14: #{tpu_custom_call.1} parent=1 // pred_check
      _
    $region15: #{tpu_custom_call.1} parent=1 // pred_check_branch
      %21 = sbr.rel (0) target = $region17
    $region16: #{tpu_custom_call.1} parent=1 // pred_region
      _
    $region17: #{tpu_custom_call.1} parent=1 // pred_fallthru
      _
    // Predicated region
    $region18: #{tpu_custom_call.1} parent=1 // pred_check
      _
    $region19: #{tpu_custom_call.1} parent=1 // pred_check_branch
      %23 = sbr.rel (0) target = $region21
    $region20: #{tpu_custom_call.1} parent=1 // pred_region
      _
    $region21: #{tpu_custom_call.1} parent=1 // pred_fallthru
      _
    // Predicated region
    $region22: #{tpu_custom_call.1} parent=1 // pred_check
      _
    $region23: #{tpu_custom_call.1} parent=1 // pred_check_branch
      %25 = sbr.rel (0) target = $region25
    $region24: #{tpu_custom_call.1} parent=1 // pred_region
      %s27 = ssub.s32 2048, 2048
      %28 = vsyncadd [#allocation3], %s27
      %s29 = sshll.u32 [#allocation2], 4
      %s30 = int_to_ptr.vmem [resolvable:$true] %s29
      %35 = dma.hbm_to_vmem [thread:$0]  %s5, 2048, %s30, [#allocation3], 128, 128, 8
    $region25: #{tpu_custom_call.1} parent=1 // pred_fallthru
      _
    // Predicated region
    $region26: #{tpu_custom_call.1} parent=1 // pred_check
      _
    $region27: #{tpu_custom_call.1} parent=1 // pred_check_branch
      %37 = sbr.rel (0) target = $region29
    $region28: #{tpu_custom_call.1} parent=1 // pred_region
      _
    $region29: #{tpu_custom_call.1} parent=1 // pred_fallthru
      _
    // Predicated region
    $region30: #{tpu_custom_call.1} parent=1 // pred_check
      _
    $region31: #{tpu_custom_call.1} parent=1 // pred_check_branch
      %39 = sbr.rel (0) target = $region33
    $region32: #{tpu_custom_call.1} parent=1 // pred_region
      %40 = dma.done [#allocation3], 2048
    $region33: #{tpu_custom_call.1} parent=1 // pred_fallthru
      _
    %v42 = vld [vmem:[%s0] sm:$0xff]
    %v43 = vld [vmem:[%s0 + $0x8] sm:$0xff]
    %v44 = vld [vmem:[%s0 + $0x10] sm:$0xff]
    %v45 = vld [vmem:[%s0 + $0x18] sm:$0xff]
    %v46 = vld [vmem:[%s0 + $0x20] sm:$0xff]
    %v47 = vld [vmem:[%s0 + $0x28] sm:$0xff]
    %v48 = vld [vmem:[%s0 + $0x30] sm:$0xff]
    %v49 = vld [vmem:[%s0 + $0x38] sm:$0xff]
    %v50 = vpack.c.bf16 %v43, %v42
    %v51 = vpack.c.bf16 %v45, %v44
    %v52 = vpack.c.bf16 %v47, %v46
    %v53 = vpack.c.bf16 %v49, %v48
    %v54 = vld [vmem:[%s1] sm:$0xf]
    %v55 = vld [vmem:[%s1 + $0x4] sm:$0xf]
    %v56 = vld [vmem:[%s1 + $0x8] sm:$0xf]
    %v57 = vld [vmem:[%s1 + $0xc] sm:$0xf]
    %v58 = vld [vmem:[%s2] sm:$0x1]
    %v60 = vlaneseq
    %v61 = vshrl.u32 %v60, 7
    %v62 = vsub.s32 0, %v61
    %v63 = vrot.slane %v58, %v62
    %v69 = vunpack.c.l.b16 %v54
    %v70 = vunpack.c.l.b16 %v55
    %v71 = vunpack.c.l.b16 %v56
    %v72 = vunpack.c.l.b16 %v57
    %v73 = vpack.c.b16 %v70, %v69
    %v74 = vpack.c.b16 %v72, %v71
    %vm77 = vcmask 261120
    %v79 = vsel %vm77, %v50, 0
    %v82 = vsel %vm77, %v51, 0
    %v85 = vsel %vm77, %v52, 0
    %v88 = vsel %vm77, %v53, 0
    %90 = vmatprep.subr.bf16.mxu0 0
    %91 = vmatpush1.bf16.msra.mxu0 0
    %92 = vmatprep.subr.bf16.mxu0 0
    %93 = vmatpush1.bf16.msra.mxu0 0
    %94 = vmatprep.subr.bf16.mxu0 0
    %95 = vmatpush1.bf16.msra.mxu0 0
    %96 = vmatprep.subr.bf16.mxu0 0
    %97 = vmatpush1.bf16.msra.mxu0 0
    %98 = vmatprep.subr.bf16.mxu0 0
    %99 = vmatpush1.bf16.msra.mxu0 0
    %100 = vmatprep.subr.bf16.mxu0 0
    %101 = vmatpush1.bf16.msra.mxu0 0
    %102 = vmatprep.subr.bf16.mxu0 0
    %103 = vmatpush1.bf16.msra.mxu0 %v74
    %104 = vmatprep.subr.bf16.mxu0 0
    %105 = vmatpush1.bf16.msra.mxu0 %v73
    %106 = vmatprep.subr.bf16.mxu0 0
    %107 = vmatpush2.bf16.msra.mxu0 0
    %108 = vmatprep.subr.bf16.mxu0 0
    %109 = vmatpush2.bf16.msra.mxu0 0
    %110 = vmatprep.subr.bf16.mxu0 0
    %111 = vmatpush2.bf16.msra.mxu0 0
    %112 = vmatprep.subr.bf16.mxu0 0
    %113 = vmatpush2.bf16.msra.mxu0 0
    %114 = vmatprep.subr.bf16.mxu0 0
    %115 = vmatpush2.bf16.msra.mxu0 0
    %116 = vmatprep.subr.bf16.mxu0 0
    %117 = vmatpush2.bf16.msra.mxu0 0
    %118 = vmatprep.subr.bf16.mxu0 0
    %119 = vmatpush2.bf16.msra.mxu0 0
    %120 = vmatprep.subr.bf16.mxu0 0
    %121 = vmatpush2.bf16.msra.mxu0 0
    %122 = vmatprep.mubr.bf16.mxu0 0
    %123 = vmatmul.mubr.bf16.gmra.mxu0 %v79
    %v124 = vpop.f32.mrf.mxu0
    %v125 = vadd.f32 %v63, %v124
    %v126 = vpop.f32.mrf.mxu0
    %v127 = vpop.f32.mrf.mxu0
    %v128 = vadd.f32 %v63, %v127
    %v129 = vpop.f32.mrf.mxu0
    %130 = vmatprep.mubr.bf16.mxu0 0
    %131 = vmatmul.mubr.bf16.gmra.mxu0 %v82
    %v132 = vpop.f32.mrf.mxu0
    %v133 = vadd.f32 %v63, %v132
    %v134 = vpop.f32.mrf.mxu0
    %v135 = vpop.f32.mrf.mxu0
    %v136 = vadd.f32 %v63, %v135
    %v137 = vpop.f32.mrf.mxu0
    %138 = vmatprep.mubr.bf16.mxu0 0
    %139 = vmatmul.mubr.bf16.gmra.mxu0 %v85
    %v140 = vpop.f32.mrf.mxu0
    %v141 = vadd.f32 %v63, %v140
    %v142 = vpop.f32.mrf.mxu0
    %v143 = vpop.f32.mrf.mxu0
    %v144 = vadd.f32 %v63, %v143
    %v145 = vpop.f32.mrf.mxu0
    %146 = vmatprep.mubr.bf16.mxu0 0
    %147 = vmatmul.mubr.bf16.gmra.mxu0 %v88
    %v148 = vpop.f32.mrf.mxu0
    %v149 = vadd.f32 %v63, %v148
    %v150 = vpop.f32.mrf.mxu0
    %v151 = vpop.f32.mrf.mxu0
    %v152 = vadd.f32 %v63, %v151
    %v153 = vpop.f32.mrf.mxu0
    %154 = vdwg.mxu0
    %v155 = vmax.f32 %v125, 0.0
    %v156 = vmax.f32 %v128, 0.0
    %v157 = vmax.f32 %v133, 0.0
    %v158 = vmax.f32 %v136, 0.0
    %v159 = vmax.f32 %v141, 0.0
    %v160 = vmax.f32 %v144, 0.0
    %v161 = vmax.f32 %v149, 0.0
    %v162 = vmax.f32 %v152, 0.0
    %v163 = vpack.c.bf16 %v156, %v155
    %v164 = vpack.c.bf16 %v158, %v157
    %v165 = vpack.c.bf16 %v160, %v159
    %v166 = vpack.c.bf16 %v162, %v161
    %v167 = vld [vmem:[%s3] sm:$0xf]
    %v168 = vld [vmem:[%s3 + $0x4] sm:$0xf]
    %v169 = vld [vmem:[%s3 + $0x8] sm:$0xf]
    %v170 = vld [vmem:[%s3 + $0xc] sm:$0xf]
    %v171 = vld [vmem:[%s3 + $0x10] sm:$0xf]
    %v172 = vld [vmem:[%s3 + $0x14] sm:$0xf]
    %v173 = vld [vmem:[%s3 + $0x18] sm:$0xf]
    %v174 = vld [vmem:[%s3 + $0x1c] sm:$0xf]
    %v175 = vld [vmem:[%s3 + $0x20] sm:$0xf]
    %v176 = vld [vmem:[%s3 + $0x24] sm:$0xf]
    %v177 = vld [vmem:[%s3 + $0x28] sm:$0xf]
    %v178 = vld [vmem:[%s3 + $0x2c] sm:$0xf]
    %v179 = vld [vmem:[%s3 + $0x30] sm:$0xf]
    %v180 = vld [vmem:[%s3 + $0x34] sm:$0xf]
    %v181 = vld [vmem:[%s3 + $0x38] sm:$0xf]
    %v182 = vld [vmem:[%s3 + $0x3c] sm:$0xf]
    %v183 = vld [vmem:[%s4] sm:$0x1]
    %v185 = vlaneseq
    %v186 = vshrl.u32 %v185, 7
    %v187 = vsub.s32 0, %v186
    %v188 = vrot.slane %v183, %v187
    %v206 = vunpack.c.l.b16 %v167
    %v207 = vunpack.c.l.b16 %v168
    %v208 = vunpack.c.l.b16 %v169
    %v209 = vunpack.c.l.b16 %v170
    %v210 = vunpack.c.l.b16 %v171
    %v211 = vunpack.c.l.b16 %v172
    %v212 = vunpack.c.l.b16 %v173
    %v213 = vunpack.c.l.b16 %v174
    %v214 = vunpack.c.l.b16 %v175
    %v215 = vunpack.c.l.b16 %v176
    %v216 = vunpack.c.l.b16 %v177
    %v217 = vunpack.c.l.b16 %v178
    %v218 = vunpack.c.l.b16 %v179
    %v219 = vunpack.c.l.b16 %v180
    %v220 = vunpack.c.l.b16 %v181
    %v221 = vunpack.c.l.b16 %v182
    %v222 = vpack.c.b16 %v207, %v206
    %v223 = vpack.c.b16 %v209, %v208
    %v224 = vpack.c.b16 %v211, %v210
    %v225 = vpack.c.b16 %v213, %v212
    %v226 = vpack.c.b16 %v215, %v214
    %v227 = vpack.c.b16 %v217, %v216
    %v228 = vpack.c.b16 %v219, %v218
    %v229 = vpack.c.b16 %v221, %v220
    %238 = vmatprep.subr.bf16.mxu0 0
    %239 = vmatpush1.bf16.msra.mxu0 %v229
    %240 = vmatprep.subr.bf16.mxu0 0
    %241 = vmatpush1.bf16.msra.mxu0 %v228
    %242 = vmatprep.subr.bf16.mxu0 0
    %243 = vmatpush1.bf16.msra.mxu0 %v227
    %244 = vmatprep.subr.bf16.mxu0 0
    %245 = vmatpush1.bf16.msra.mxu0 %v226
    %246 = vmatprep.subr.bf16.mxu0 0
    %247 = vmatpush1.bf16.msra.mxu0 %v225
    %248 = vmatprep.subr.bf16.mxu0 0
    %249 = vmatpush1.bf16.msra.mxu0 %v224
    %250 = vmatprep.subr.bf16.mxu0 0
    %251 = vmatpush1.bf16.msra.mxu0 %v223
    %252 = vmatprep.subr.bf16.mxu0 0
    %253 = vmatpush1.bf16.msra.mxu0 %v222
    %254 = vmatprep.subr.bf16.mxu0 0
    %255 = vmatpush2.bf16.msra.mxu0 0
    %256 = vmatprep.subr.bf16.mxu0 0
    %257 = vmatpush2.bf16.msra.mxu0 0
    %258 = vmatprep.subr.bf16.mxu0 0
    %259 = vmatpush2.bf16.msra.mxu0 0
    %260 = vmatprep.subr.bf16.mxu0 0
    %261 = vmatpush2.bf16.msra.mxu0 0
    %262 = vmatprep.subr.bf16.mxu0 0
    %263 = vmatpush2.bf16.msra.mxu0 0
    %264 = vmatprep.subr.bf16.mxu0 0
    %265 = vmatpush2.bf16.msra.mxu0 0
    %266 = vmatprep.subr.bf16.mxu0 0
    %267 = vmatpush2.bf16.msra.mxu0 0
    %268 = vmatprep.subr.bf16.mxu0 0
    %269 = vmatpush2.bf16.msra.mxu0 0
    %270 = vmatprep.mubr.bf16.mxu0 0
    %271 = vmatmul.mubr.bf16.gmra.mxu0 %v163
    %v272 = vpop.f32.mrf.mxu0
    %v273 = vadd.f32 %v188, %v272
    %v274 = vpop.f32.mrf.mxu0
    %v275 = vpop.f32.mrf.mxu0
    %v276 = vadd.f32 %v188, %v275
    %v277 = vpop.f32.mrf.mxu0
    %278 = vmatprep.mubr.bf16.mxu0 0
    %279 = vmatmul.mubr.bf16.gmra.mxu0 %v164
    %v280 = vpop.f32.mrf.mxu0
    %v281 = vadd.f32 %v188, %v280
    %v282 = vpop.f32.mrf.mxu0
    %v283 = vpop.f32.mrf.mxu0
    %v284 = vadd.f32 %v188, %v283
    %v285 = vpop.f32.mrf.mxu0
    %286 = vmatprep.mubr.bf16.mxu0 0
    %287 = vmatmul.mubr.bf16.gmra.mxu0 %v165
    %v288 = vpop.f32.mrf.mxu0
    %v289 = vadd.f32 %v188, %v288
    %v290 = vpop.f32.mrf.mxu0
    %v291 = vpop.f32.mrf.mxu0
    %v292 = vadd.f32 %v188, %v291
    %v293 = vpop.f32.mrf.mxu0
    %294 = vmatprep.mubr.bf16.mxu0 0
    %295 = vmatmul.mubr.bf16.gmra.mxu0 %v166
    %v296 = vpop.f32.mrf.mxu0
    %v297 = vadd.f32 %v188, %v296
    %v298 = vpop.f32.mrf.mxu0
    %v299 = vpop.f32.mrf.mxu0
    %v300 = vadd.f32 %v188, %v299
    %v301 = vpop.f32.mrf.mxu0
    %302 = vdwg.mxu0
    %v303 = vmax.f32 %v273, 0.0
    %v304 = vmax.f32 %v276, 0.0
    %v305 = vmax.f32 %v281, 0.0
    %v306 = vmax.f32 %v284, 0.0
    %v307 = vmax.f32 %v289, 0.0
    %v308 = vmax.f32 %v292, 0.0
    %v309 = vmax.f32 %v297, 0.0
    %v310 = vmax.f32 %v300, 0.0
    %v311 = vld [vmem:[#allocation2] sm:$0xff]
    %v312 = vld [vmem:[#allocation2 + $0x8] sm:$0xff]
    %v313 = vld [vmem:[#allocation2 + $0x10] sm:$0xff]
    %v314 = vld [vmem:[#allocation2 + $0x18] sm:$0xff]
    %v315 = vld [vmem:[#allocation2 + $0x20] sm:$0xff]
    %v316 = vld [vmem:[#allocation2 + $0x28] sm:$0xff]
    %v317 = vld [vmem:[#allocation2 + $0x30] sm:$0xff]
    %v318 = vld [vmem:[#allocation2 + $0x38] sm:$0xff]
    %v319 = vld [vmem:[#allocation2 + $0x40] sm:$0xff]
    %v320 = vld [vmem:[#allocation2 + $0x48] sm:$0xff]
    %v321 = vld [vmem:[#allocation2 + $0x50] sm:$0xff]
    %v322 = vld [vmem:[#allocation2 + $0x58] sm:$0xff]
    %v323 = vld [vmem:[#allocation2 + $0x60] sm:$0xff]
    %v324 = vld [vmem:[#allocation2 + $0x68] sm:$0xff]
    %v325 = vld [vmem:[#allocation2 + $0x70] sm:$0xff]
    %v326 = vld [vmem:[#allocation2 + $0x78] sm:$0xff]
    %v327 = vld [vmem:[%s6] sm:$0x1]
    %v329 = vlaneseq
    %v330 = vshrl.u32 %v329, 7
    %v331 = vsub.s32 0, %v330
    %v332 = vrot.slane %v327, %v331
    %334 = vmatprep.subr.mxu0 0.0
    %335 = vmatpush1.msra.mxu0 %v326
    %336 = vmatprep.subr.mxu0 0.0
    %337 = vmatpush1.msra.mxu0 %v325
    %338 = vmatprep.subr.mxu0 0.0
    %339 = vmatpush1.msra.mxu0 %v324
    %340 = vmatprep.subr.mxu0 0.0
    %341 = vmatpush1.msra.mxu0 %v323
    %342 = vmatprep.subr.mxu0 0.0
    %343 = vmatpush1.msra.mxu0 %v322
    %344 = vmatprep.subr.mxu0 0.0
    %345 = vmatpush1.msra.mxu0 %v321
    %346 = vmatprep.subr.mxu0 0.0
    %347 = vmatpush1.msra.mxu0 %v320
    %348 = vmatprep.subr.mxu0 0.0
    %349 = vmatpush1.msra.mxu0 %v319
    %350 = vmatprep.subr.mxu0 0.0
    %351 = vmatpush1.msra.mxu0 %v318
    %352 = vmatprep.subr.mxu0 0.0
    %353 = vmatpush1.msra.mxu0 %v317
    %354 = vmatprep.subr.mxu0 0.0
    %355 = vmatpush1.msra.mxu0 %v316
    %356 = vmatprep.subr.mxu0 0.0
    %357 = vmatpush1.msra.mxu0 %v315
    %358 = vmatprep.subr.mxu0 0.0
    %359 = vmatpush1.msra.mxu0 %v314
    %360 = vmatprep.subr.mxu0 0.0
    %361 = vmatpush1.msra.mxu0 %v313
    %362 = vmatprep.subr.mxu0 0.0
    %363 = vmatpush1.msra.mxu0 %v312
    %364 = vmatprep.subr.mxu0 0.0
    %365 = vmatpush1.msra.mxu0 %v311
    %366 = vmatprep.subr.mxu0 0.0
    %367 = vmatpush2.msra.mxu0 0.0
    %368 = vmatprep.subr.mxu0 0.0
    %369 = vmatpush2.msra.mxu0 0.0
    %370 = vmatprep.subr.mxu0 0.0
    %371 = vmatpush2.msra.mxu0 0.0
    %372 = vmatprep.subr.mxu0 0.0
    %373 = vmatpush2.msra.mxu0 0.0
    %374 = vmatprep.subr.mxu0 0.0
    %375 = vmatpush2.msra.mxu0 0.0
    %376 = vmatprep.subr.mxu0 0.0
    %377 = vmatpush2.msra.mxu0 0.0
    %378 = vmatprep.subr.mxu0 0.0
    %379 = vmatpush2.msra.mxu0 0.0
    %380 = vmatprep.subr.mxu0 0.0
    %381 = vmatpush2.msra.mxu0 0.0
    %382 = vmatprep.subr.mxu0 0.0
    %383 = vmatpush2.msra.mxu0 0.0
    %384 = vmatprep.subr.mxu0 0.0
    %385 = vmatpush2.msra.mxu0 0.0
    %386 = vmatprep.subr.mxu0 0.0
    %387 = vmatpush2.msra.mxu0 0.0
    %388 = vmatprep.subr.mxu0 0.0
    %389 = vmatpush2.msra.mxu0 0.0
    %390 = vmatprep.subr.mxu0 0.0
    %391 = vmatpush2.msra.mxu0 0.0
    %392 = vmatprep.subr.mxu0 0.0
    %393 = vmatpush2.msra.mxu0 0.0
    %394 = vmatprep.subr.mxu0 0.0
    %395 = vmatpush2.msra.mxu0 0.0
    %396 = vmatprep.subr.mxu0 0.0
    %397 = vmatpush2.msra.mxu0 0.0
    %398 = vmatprep.mubr.f32.mxu0 0.0
    %399 = vmatmul.mubr.f32.gmra.mxu0 %v303
    %v400 = vpop.f32.mrf.mxu0
    %v401 = vadd.f32 %v332, %v400
    %v402 = vpop.f32.mrf.mxu0
    %403 = vmatprep.mubr.f32.mxu0 0.0
    %404 = vmatmul.mubr.f32.gmra.mxu0 %v304
    %v405 = vpop.f32.mrf.mxu0
    %v406 = vadd.f32 %v332, %v405
    %v407 = vpop.f32.mrf.mxu0
    %408 = vmatprep.mubr.f32.mxu0 0.0
    %409 = vmatmul.mubr.f32.gmra.mxu0 %v305
    %v410 = vpop.f32.mrf.mxu0
    %v411 = vadd.f32 %v332, %v410
    %v412 = vpop.f32.mrf.mxu0
    %413 = vmatprep.mubr.f32.mxu0 0.0
    %414 = vmatmul.mubr.f32.gmra.mxu0 %v306
    %v415 = vpop.f32.mrf.mxu0
    %v416 = vadd.f32 %v332, %v415
    %v417 = vpop.f32.mrf.mxu0
    %418 = vmatprep.mubr.f32.mxu0 0.0
    %419 = vmatmul.mubr.f32.gmra.mxu0 %v307
    %v420 = vpop.f32.mrf.mxu0
    %v421 = vadd.f32 %v332, %v420
    %v422 = vpop.f32.mrf.mxu0
    %423 = vmatprep.mubr.f32.mxu0 0.0
    %424 = vmatmul.mubr.f32.gmra.mxu0 %v308
    %v425 = vpop.f32.mrf.mxu0
    %v426 = vadd.f32 %v332, %v425
    %v427 = vpop.f32.mrf.mxu0
    %428 = vmatprep.mubr.f32.mxu0 0.0
    %429 = vmatmul.mubr.f32.gmra.mxu0 %v309
    %v430 = vpop.f32.mrf.mxu0
    %v431 = vadd.f32 %v332, %v430
    %v432 = vpop.f32.mrf.mxu0
    %433 = vmatprep.mubr.f32.mxu0 0.0
    %434 = vmatmul.mubr.f32.gmra.mxu0 %v310
    %v435 = vpop.f32.mrf.mxu0
    %v436 = vadd.f32 %v332, %v435
    %v437 = vpop.f32.mrf.mxu0
    %438 = vdwg.mxu0
    %v439 = vpack.c.bf16 %v406, %v401
    %v440 = vpack.c.bf16 %v416, %v411
    %v441 = vpack.c.bf16 %v426, %v421
    %v442 = vpack.c.bf16 %v436, %v431
    %v447 = vunpack.c.l.b16 %v439
    %v448 = vunpack.c.h.b16 %v439
    %v449 = vunpack.c.l.b16 %v440
    %v450 = vunpack.c.h.b16 %v440
    %v451 = vunpack.c.l.b16 %v441
    %v452 = vunpack.c.h.b16 %v441
    %v453 = vunpack.c.l.b16 %v442
    %v454 = vunpack.c.h.b16 %v442
    %v455 = vpack.c.b16 %v447, %v447
    %v456 = vpack.c.b16 %v448, %v448
    %v457 = vpack.c.b16 %v449, %v449
    %v458 = vpack.c.b16 %v450, %v450
    %v459 = vpack.c.b16 %v451, %v451
    %v460 = vpack.c.b16 %v452, %v452
    %v461 = vpack.c.b16 %v453, %v453
    %v462 = vpack.c.b16 %v454, %v454
    %471 = vst [vmem:[#allocation5] sm:$0xf] %v455
    %472 = vst [vmem:[#allocation5 + $0x4] sm:$0xf] %v456
    %473 = vst [vmem:[#allocation5 + $0x8] sm:$0xf] %v457
    %474 = vst [vmem:[#allocation5 + $0xc] sm:$0xf] %v458
    %475 = vst [vmem:[#allocation5 + $0x10] sm:$0xf] %v459
    %476 = vst [vmem:[#allocation5 + $0x14] sm:$0xf] %v460
    %477 = vst [vmem:[#allocation5 + $0x18] sm:$0xf] %v461
    %478 = vst [vmem:[#allocation5 + $0x1c] sm:$0xf] %v462
    // Predicated region
    $region34: #{tpu_custom_call.1} parent=1 // pred_check
      _
    $region35: #{tpu_custom_call.1} parent=1 // pred_check_branch
      %480 = sbr.rel (0) target = $region37
    $region36: #{tpu_custom_call.1} parent=1 // pred_region
      %s482 = ssub.s32 512, 512
      %483 = vsyncadd [#allocation4], %s482
      %s484 = sshll.u32 [#allocation5], 4
      %s485 = int_to_ptr.vmem [resolvable:$true] %s484
      %490 = dma.vmem_to_hbm [thread:$0]  %s485, 512, %s7, [#allocation4], 64, 64, 4
    $region37: #{tpu_custom_call.1} parent=1 // pred_fallthru
      _
    // Predicated region
    $region38: #{tpu_custom_call.1} parent=1 // pred_check
      _
    $region39: #{tpu_custom_call.1} parent=1 // pred_check_branch
      %492 = sbr.rel (0) target = $region41
    $region40: #{tpu_custom_call.1} parent=1 // pred_region
      %493 = dma.done [#allocation4], 512
    $region41: #{tpu_custom_call.1} parent=1 // pred_fallthru
      _
    %494 = vsyncpa [#allocation3], 1
    %495 = vsyncpa [#allocation4], 1

</llo_original>
